<compile_context>
chip_gen: v7x
topology: tpu7x:2x2x1
jax: 0.10.0
libtpu: 0.0.40
codegen_flags: <defaults>
</compile_context>

<pallas_src>
import math

import numpy as np
import jax
import jax.numpy as jnp
from jax.experimental import pallas as pl
from jax.experimental.pallas import tpu as pltpu


_VMEM_WORKING_SET_BUDGET = 40 * 1024 * 1024   # per-step working set target (fits v7x 64 MiB)
_VMEM_LIMIT_BYTES = 48 * 1024 * 1024          # explicit scoped-VMEM limit (v5e default: 16 MiB)


# ----------------------------- D4 group tables ------------------------------
# Elements indexed g = s*4 + r (r = #90deg rotations, s = flip bit).
def _d4_tables():
    mul = np.zeros((8, 8), dtype=np.int32)
    for s1 in range(2):
        for r1 in range(4):
            for s2 in range(2):
                for r2 in range(4):
                    g1, g2 = s1 * 4 + r1, s2 * 4 + r2
                    s = (s1 + s2) % 2
                    r = ((r1 if s2 == 0 else -r1) + r2) % 4
                    mul[g1, g2] = s * 4 + r
    inv = np.zeros((8,), dtype=np.int32)
    for g in range(8):
        inv[g] = int(np.where(mul[g] == 0)[0][0])
    return mul, inv


_D4_MUL, _D4_INV = _d4_tables()

D4_subgroups = {
    "trivial": {"name": "trivial", "members": [0]},
    "D4": {"name": "D4", "members": list(range(8))},
}


def _round_up(x, m):
    return ((x + m - 1) // m) * m


# --------------------- primary path: weight-resident grid ---------------------
def _wres_kernel(x_ref, w_ref, b_ref, o_ref):
    # x tile arrives in the caller's dtype (usually f32) and is cast to the
    # weight dtype in-kernel, so the wrapper never materialises a bf16 copy of
    # the activations in HBM.
    x = x_ref[...].astype(w_ref.dtype)
    acc = jnp.dot(x, w_ref[...], preferred_element_type=jnp.float32)
    o_ref[...] = (acc + b_ref[...]).astype(o_ref.dtype)


def _group_linear_wres(x, w_kn, b_n, *, out_dtype, tb, tn):
    """out = x @ w_kn + b_n with a VMEM-resident (Kp, tn) weight stripe.

    grid = (N_tiles, B_tiles), N OUTER: across consecutive batch steps the
    weight/bias block index is unchanged, so Pallas skips their re-DMA — each
    weight stripe crosses HBM exactly once per call.  The batch axis uses
    cdiv, so the last partial block is handled by dropped out-of-bounds writes.
    """
    B, Kp = x.shape
    _, Np = w_kn.shape
    grid = (Np // tn, pl.cdiv(B, tb))
    return pl.pallas_call(
        _wres_kernel,
        out_shape=jax.ShapeDtypeStruct((B, Np), out_dtype),
        grid_spec=pltpu.PrefetchScalarGridSpec(
            num_scalar_prefetch=0,
            grid=grid,
            in_specs=[
                pl.BlockSpec((tb, Kp), lambda j, i: (i, 0)),  # activations: stream over B
                pl.BlockSpec((Kp, tn), lambda j, i: (0, j)),  # weight stripe: resident over i
                pl.BlockSpec((1, tn), lambda j, i: (0, j)),   # bias stripe: resident over i
            ],
            out_specs=pl.BlockSpec((tb, tn), lambda j, i: (i, j)),
        ),
        compiler_params=pltpu.CompilerParams(
            dimension_semantics=("parallel", "parallel"),
            vmem_limit_bytes=_VMEM_LIMIT_BYTES,
        ),
    )(x, w_kn, b_n)


# -------------------- fallback path: K-streamed reduction --------------------
def _kstream_kernel(x_ref, w_ref, b_ref, o_ref, acc_ref):
    k = pl.program_id(2)

    @pl.when(k == 0)
    def _():
        acc_ref[...] = jnp.zeros_like(acc_ref)

    acc_ref[...] += jnp.dot(x_ref[...].astype(w_ref.dtype), w_ref[...],
                            preferred_element_type=jnp.float32)

    @pl.when(k == pl.num_programs(2) - 1)
    def _():
        o_ref[...] = (acc_ref[...] + b_ref[...]).astype(o_ref.dtype)


def _group_linear_kstream(x, w_kn, b_n, *, out_dtype, tb, tn, tk):
    """Fallback for huge K: (B, N, K) grid with an f32 VMEM accumulator."""
    B, Kp = x.shape
    _, Np = w_kn.shape
    grid = (pl.cdiv(B, tb), Np // tn, Kp // tk)
    return pl.pallas_call(
        _kstream_kernel,
        out_shape=jax.ShapeDtypeStruct((B, Np), out_dtype),
        grid_spec=pltpu.PrefetchScalarGridSpec(
            num_scalar_prefetch=0,
            grid=grid,
            in_specs=[
                pl.BlockSpec((tb, tk), lambda i, j, k: (i, k)),
                # TODO(synk): add pipeline_mode=pl.Buffered(3) on the weight spec
                # if the weight-tile DMA shows up as exposed in this path.
                pl.BlockSpec((tk, tn), lambda i, j, k: (k, j)),
                pl.BlockSpec((1, tn), lambda i, j, k: (0, j)),
            ],
            out_specs=pl.BlockSpec((tb, tn), lambda i, j, k: (i, j)),
            scratch_shapes=[pltpu.VMEM((tb, tn), jnp.float32)],
        ),
        compiler_params=pltpu.CompilerParams(
            dimension_semantics=("parallel", "parallel", "arbitrary"),
            vmem_limit_bytes=_VMEM_LIMIT_BYTES,
        ),
    )(x, w_kn, b_n)


# ---------------------------- Module-style wrapper ----------------------------
class D4GroupLinear:
    _MAX_TB = 512    # batch tile cap (raised 256->512 per perf review)
    _MAX_TN = 1024   # output tile cap (raised 512->1024), multiple of 128
    _MAX_TK = 512    # K tile for the streamed fallback

    def __init__(self, in_group, out_group, in_features, out_features, bias=True,
                 *, key, compute_dtype=jnp.bfloat16):
        if in_group != out_group and in_group != "trivial":
            raise NotImplementedError("Only in_group == out_group or in_group='trivial'.")
        self.in_group_name = in_group
        self.out_group_name = out_group
        self.in_group_order = len(D4_subgroups[in_group]["members"])
        self.out_group_order = len(D4_subgroups[out_group]["members"])
        self.in_features = in_features
        self.out_features = out_features
        self.compute_dtype = compute_dtype

        self.K = in_features * self.in_group_order     # contraction dim
        self.N = out_features * self.out_group_order   # output dim

        # kaiming_uniform_(a=sqrt(5)) on the (O, I*Gi)-flattened weight reduces to
        # U(-1/sqrt(fan_in), 1/sqrt(fan_in)), same bound as the bias init.
        fan_in = self.K
        bound = 1.0 / math.sqrt(fan_in) if fan_in > 0 else 0.0
        kw, kb = jax.random.split(key)
        self.weight = jax.random.uniform(
            kw, (out_features, in_features, self.in_group_order),
            minval=-bound, maxval=bound, dtype=jnp.float32)
        self.bias = (
            jax.random.uniform(kb, (out_features,), minval=-bound, maxval=bound,
                               dtype=jnp.float32)
            if bias else None)

        self._pick_tiles()
        # Pre-expand + pre-pad + pre-cast the weight ONCE (inference-style cache;
        # re-invoke _build_cached_weight() if self.weight / self.bias are updated).
        self._build_cached_weight()

    # ------------------------------- tiling -------------------------------
    def _wres_working_set(self, tn, kp):
        # Double-buffered per-step footprint: f32 x tile + bf16 weight stripe
        # + (up to f32) out tile + f32 bias stripe.
        return 2 * (self._MAX_TB * kp * 4 + kp * tn * 2
                    + self._MAX_TB * tn * 4 + tn * 4)

    def _pick_tiles(self):
        kp = _round_up(self.K, 8)   # sublane-aligned; a no-op whenever Gi == 8
        tn = min(self._MAX_TN, _round_up(self.N, 128))
        # Shrink tn (never tb) first if the full-K weight stripe would blow the
        # per-step VMEM budget; only truly huge K falls back to K-streaming.
        while self._wres_working_set(tn, kp) > _VMEM_WORKING_SET_BUDGET and tn > 128:
            tn -= 128
        if self._wres_working_set(tn, kp) <= _VMEM_WORKING_SET_BUDGET:
            self._mode = "wres"
            self._tn = tn
            self._tk = None
            self._Kp = kp
        else:
            self._mode = "kstream"
            self._tk = min(self._MAX_TK, _round_up(self.K, 128))
            self._tn = min(self._MAX_TN, _round_up(self.N, 128))
            self._Kp = _round_up(self.K, self._tk)
        self._Np = _round_up(self.N, self._tn)

    # ---- group expansion (index glue, done once, outside the hot path) ----
    def _expand_weight_f32(self):
        """(O, I, Go, Gi) f32 expanded weight (regular-rep / lifting law)."""
        O, I, Gi = self.weight.shape
        Go = self.out_group_order
        if self.in_group_name == "trivial":
            # lifting layer: identical weight for every output group element
            return jnp.broadcast_to(self.weight[:, :, None, :], (O, I, Go, Gi))
        # regular-rep law: W_g[..., h] = W[..., g^{-1} h]
        perm = _D4_MUL[_D4_INV]                 # (Go, Gi): perm[g, h] = inv(g)*h
        return self.weight[:, :, perm]          # (O, I, Go, Gi)

    def _build_cached_weight(self):
        Go = self.out_group_order
        w4 = self._expand_weight_f32()                                  # (O, I, Go, Gi)
        # Built directly in (K, N) = (i*Gi+h, o*Go+g) layout — no per-call transpose.
        w_kn = jnp.transpose(w4, (1, 3, 0, 2)).reshape(self.K, self.N)
        w_kn = jnp.pad(w_kn, ((0, self._Kp - self.K), (0, self._Np - self.N)))
        self._w_kn = w_kn.astype(self.compute_dtype)                    # (Kp, Np) bf16

        bias = self.bias if self.bias is not None else jnp.zeros(
            (self.out_features,), jnp.float32)
        b_n = jnp.repeat(bias.astype(jnp.float32), Go)                  # (N,)
        self._b_n = jnp.pad(b_n, (0, self._Np - self.N)).reshape(1, self._Np)

        # TODO(synk): weight-bound (small-batch serving) path — keep the raw
        # (K, O) weight and permute x's Gi lanes in-kernel (pltpu.roll + one
        # reflection swizzle on the idle XLU slot) instead of streaming the
        # |Go|x-expanded weight (~8x weight-bandwidth win in that regime).

    # ------------------------------ forward ------------------------------
    def __call__(self, x):
        Gi, Go = self.in_group_order, self.out_group_order
        assert x.shape[-2:] == (self.in_features, Gi), x.shape
        lead = x.shape[:-2]
        out_dtype = x.dtype

        # No dtype cast and no batch padding here: x is read once by the kernel
        # (cast to bf16 in-kernel); partial edge blocks on the batch axis are
        # handled by the cdiv grid (out-of-bounds output writes are dropped).
        x_flat = x.reshape(-1, self.K)
        B = x_flat.shape[0]
        if self._Kp != self.K:
            # Only the contraction axis needs explicit zero padding (exact for
            # the matmul); a no-op for Gi == 8 regular-rep inputs.
            x_flat = jnp.pad(x_flat, ((0, 0), (0, self._Kp - self.K)))

        tb = min(self._MAX_TB, _round_up(max(B, 1), 16))

        if self._mode == "wres":
            out = _group_linear_wres(x_flat, self._w_kn, self._b_n,
                                     out_dtype=out_dtype, tb=tb, tn=self._tn)
        else:
            out = _group_linear_kstream(x_flat, self._w_kn, self._b_n,
                                        out_dtype=out_dtype, tb=tb,
                                        tn=self._tn, tk=self._tk)
        if self._Np != self.N:
            out = out[:, :self.N]
        return out.reshape(*lead, self.out_features, Go)


# --------------------------------- reference ----------------------------------
def reference_forward(layer, x):
    """Pure-f32 reference matching the PyTorch forward semantics."""
    Gi, Go = layer.in_group_order, layer.out_group_order
    w4 = layer._expand_weight_f32()                                     # (O, I, Go, Gi)
    w_exp = jnp.transpose(w4, (0, 2, 1, 3)).reshape(
        layer.out_features * Go, layer.in_features * Gi)                # (N, K)
    out = jnp.einsum("...k,nk->...n",
                     x.reshape(*x.shape[:-2], -1).astype(jnp.float32), w_exp,
                     precision=jax.lax.Precision.HIGHEST)
    out = out.reshape(*x.shape[:-2], layer.out_features, Go)
    if layer.bias is not None:
        out = out + layer.bias[..., None]
    return out.astype(x.dtype)


if __name__ == "__main__":
    key = jax.random.PRNGKey(0)
    kparam, kparam2, kx, kx2, kx3, kw3, kb3 = jax.random.split(key, 7)

    # --- D4 -> D4 layer (regular representation) ---
    in_features, out_features = 4, 4
    layer = D4GroupLinear("D4", "D4", in_features, out_features, bias=True, key=kparam)
    x = jax.random.normal(kx, (2, 8, in_features, layer.in_group_order), dtype=jnp.float32)
    out = jax.block_until_ready(layer(x))
    ref = reference_forward(layer, x)
    assert out.shape == (2, 8, out_features, layer.out_group_order), out.shape
    # bf16 inputs/weights with f32 MXU accumulation -> loosened tolerance vs f32 ref.
    np.testing.assert_allclose(np.asarray(out), np.asarray(ref), rtol=2e-2, atol=2e-2)

    # --- trivial -> D4 lifting layer ---
    lift = D4GroupLinear("trivial", "D4", in_features, out_features, bias=True, key=kparam2)
    x2 = jax.random.normal(kx2, (2, 8, in_features, 1), dtype=jnp.float32)
    out2 = jax.block_until_ready(lift(x2))
    ref2 = reference_forward(lift, x2)
    assert out2.shape == (2, 8, out_features, 8), out2.shape
    np.testing.assert_allclose(np.asarray(out2), np.asarray(ref2), rtol=2e-2, atol=2e-2)

    # --- K-streamed fallback path smoke test (multi-step K reduction) ---
    Bt, Kt, Nt = 32, 256, 128
    xt = jax.random.normal(kx3, (Bt, Kt), dtype=jnp.float32)
    wt = (jax.random.normal(kw3, (Kt, Nt), dtype=jnp.float32) * 0.1).astype(jnp.bfloat16)
    bt = jax.random.normal(kb3, (1, Nt), dtype=jnp.float32)
    out3 = jax.block_until_ready(
        _group_linear_kstream(xt, wt, bt, out_dtype=jnp.float32, tb=32, tn=128, tk=128))
    ref3 = jnp.einsum("bk,kn->bn",
                      xt.astype(jnp.bfloat16).astype(jnp.float32),
                      wt.astype(jnp.float32),
                      precision=jax.lax.Precision.HIGHEST) + bt
    np.testing.assert_allclose(np.asarray(out3), np.asarray(ref3), rtol=1e-2, atol=1e-2)

    print("KERNEL_OK")
</pallas_src>

<mosaic_0001>
module attributes {stable_mosaic.version = 11 : i64} {
  func.func @_wres_kernel(%arg0: i32, %arg1: i32, %arg2: memref<16x32xf32, #tpu.memory_space<vmem>>, %arg3: memref<32x128xbf16, #tpu.memory_space<vmem>>, %arg4: memref<1x128xf32, #tpu.memory_space<vmem>>, %arg5: memref<16x128xf32, #tpu.memory_space<vmem>>) attributes {dimension_semantics = [#tpu.dimension_semantics<parallel>, #tpu.dimension_semantics<parallel>], iteration_bounds = array<i64: 1, 1>, scalar_prefetch = 0 : i64, scratch_operands = 0 : i64, tpu.core_type = #tpu.core_type<tc>, window_params = [{transform_indices = @transform_0, window_bounds = array<i64: 16, 32>}, {transform_indices = @transform_1, window_bounds = array<i64: 32, 128>}, {transform_indices = @transform_2, window_bounds = array<i64: 1, 128>}, {transform_indices = @transform_3, window_bounds = array<i64: 16, 128>}]} {
    %c0 = arith.constant 0 : index
    %c0_0 = arith.constant 0 : index
    %0 = vector.load %arg2[%c0, %c0_0] : memref<16x32xf32, #tpu.memory_space<vmem>>, vector<16x32xf32>
    %1 = arith.truncf %0 : vector<16x32xf32> to vector<16x32xbf16>
    %c0_1 = arith.constant 0 : index
    %c0_2 = arith.constant 0 : index
    %2 = vector.load %arg3[%c0_1, %c0_2] : memref<32x128xbf16, #tpu.memory_space<vmem>>, vector<32x128xbf16>
    %cst = arith.constant dense<0.000000e+00> : vector<16x128xf32>
    %3 = tpu.matmul %1, %2, %cst {dimension_numbers = #tpu.dot_dimension_numbers<[1], [0], [0], [1], [0, 0, 1, 1], [], []>} : vector<16x32xbf16>, vector<32x128xbf16>, vector<16x128xf32> -> vector<16x128xf32>
    %c0_3 = arith.constant 0 : index
    %c0_4 = arith.constant 0 : index
    %4 = vector.load %arg4[%c0_3, %c0_4] : memref<1x128xf32, #tpu.memory_space<vmem>>, vector<1x128xf32>
    %5 = vector.broadcast %4 : vector<1x128xf32> to vector<16x128xf32>
    %6 = arith.addf %3, %5 : vector<16x128xf32>
    %c0_5 = arith.constant 0 : index
    %c0_6 = arith.constant 0 : index
    %7 = vector.load %arg5[%c0_5, %c0_6] : memref<16x128xf32, #tpu.memory_space<vmem>>, vector<16x128xf32>
    tpu.vector_store %arg5[%c0_5, %c0_6], %6 {strides = array<i32>} : memref<16x128xf32, #tpu.memory_space<vmem>>, vector<16x128xf32>,
    return
  }
  func.func @transform_0(%arg0: i32, %arg1: i32) -> (i32, i32) {
    %c0_i32 = arith.constant 0 : i32
    %c0_i32_0 = arith.constant 0 : i32
    return %arg1, %c0_i32 : i32, i32
  }
  func.func @transform_1(%arg0: i32, %arg1: i32) -> (i32, i32) {
    %c0_i32 = arith.constant 0 : i32
    %c0_i32_0 = arith.constant 0 : i32
    return %c0_i32, %arg0 : i32, i32
  }
  func.func @transform_2(%arg0: i32, %arg1: i32) -> (i32, i32) {
    %c0_i32 = arith.constant 0 : i32
    %c0_i32_0 = arith.constant 0 : i32
    return %c0_i32, %arg0 : i32, i32
  }
  func.func @transform_3(%arg0: i32, %arg1: i32) -> (i32, i32) {
    %c0_i32 = arith.constant 0 : i32
    return %arg1, %arg0 : i32, i32
  }
}

</mosaic_0001>

<llo_original>
// kernel: tpu_custom_call.1
$region0: #{tpu_custom_call.1}
  #allocation0 [shape = 'u32[]', space=smem, size = 0x4, offset = 0x4, fixed_abs, tag = 'smem constant byte address 0x4 - core index']
  #allocation1 [shape = 'u32[144,128]{1,0:T(1,128)}', space=vmem, size = 0x12000, scoped, tag = 'internal scratch']
  %s0 = inlined_call_operand.hbm [shape: f32[16,32], index: 0, kind: input, shape index: {}]
  %s1 = inlined_call_operand.hbm [shape: bf16[32,128], index: 1, kind: input, shape index: {}]
  %s2 = inlined_call_operand.vmem [shape: f32[1,128], index: 2, kind: input, shape index: {}]
  %s3 = inlined_call_operand.hbm [shape: f32[16,128], index: 3, kind: output, shape index: {}]
  %s4 = sld [smem:[#allocation0]]
  $region30: #{tpu_custom_call.1} parent=0
    _
  %s6 = ssub.s32 1, %s4
  %s7 = scalar_select 0, %s6, %s4
  $region1: #{tpu_custom_call.1} parent=0
    #allocation2 [shape = 'u8[8192]{0}', space=vmem, size = 0x2000, scoped, tag = 'input window, operand 0, single buffered']
    #allocation3 [shape = 's32[1]{0}', space=sflag, size = 0x4, scoped, tag = 'scoped memory for tpu_custom_call.1']
    #allocation4 [shape = 's32[1]{0}', space=sflag, size = 0x4, scoped, tag = 'scoped memory for tpu_custom_call.1']
    #allocation5 [shape = 'u8[8192]{0}', space=vmem, size = 0x2000, scoped, tag = 'input window, operand 1, single buffered']
    #allocation6 [shape = 's32[1]{0}', space=sflag, size = 0x4, scoped, tag = 'scoped memory for tpu_custom_call.1']
    #allocation7 [shape = 'u8[8192]{0}', space=vmem, size = 0x2000, scoped, tag = 'output window, operand 0, single buffered']
    %8 = vsyncpa [#allocation3], 0
    %9 = vsyncpa [#allocation6], 0
    %10 = vsyncpa [#allocation4], 0
    // Predicated region
    $region2: #{tpu_custom_call.1} parent=1 // pred_check
      _
    $region3: #{tpu_custom_call.1} parent=1 // pred_check_branch
      %12 = sbr.rel (0) target = $region5
    $region4: #{tpu_custom_call.1} parent=1 // pred_region
      %s14 = ssub.s32 256, 256
      %15 = vsyncadd [#allocation3], %s14
      %s16 = sshll.u32 [#allocation2], 4
      %s17 = int_to_ptr.vmem [resolvable:$true] %s16
      %22 = dma.hbm_to_vmem [thread:$0]  %s0, 256, %s17, [#allocation3], 128, 128, 8
    $region5: #{tpu_custom_call.1} parent=1 // pred_fallthru
      _
    // Predicated region
    $region6: #{tpu_custom_call.1} parent=1 // pred_check
      _
    $region7: #{tpu_custom_call.1} parent=1 // pred_check_branch
      %24 = sbr.rel (0) target = $region9
    $region8: #{tpu_custom_call.1} parent=1 // pred_region
      %s26 = ssub.s32 256, 256
      %27 = vsyncadd [#allocation6], %s26
      %s28 = sshll.u32 [#allocation5], 4
      %s29 = int_to_ptr.vmem [resolvable:$true] %s28
      %34 = dma.hbm_to_vmem [thread:$0]  %s1, 256, %s29, [#allocation6], 64, 64, 4
    $region9: #{tpu_custom_call.1} parent=1 // pred_fallthru
      _
    // Predicated region
    $region10: #{tpu_custom_call.1} parent=1 // pred_check
      _
    $region11: #{tpu_custom_call.1} parent=1 // pred_check_branch
      %36 = sbr.rel (0) target = $region13
    $region12: #{tpu_custom_call.1} parent=1 // pred_region
      _
    $region13: #{tpu_custom_call.1} parent=1 // pred_fallthru
      _
    // Predicated region
    $region14: #{tpu_custom_call.1} parent=1 // pred_check
      _
    $region15: #{tpu_custom_call.1} parent=1 // pred_check_branch
      %38 = sbr.rel (0) target = $region17
    $region16: #{tpu_custom_call.1} parent=1 // pred_region
      %39 = dma.done [#allocation3], 256
    $region17: #{tpu_custom_call.1} parent=1 // pred_fallthru
      _
    // Predicated region
    $region18: #{tpu_custom_call.1} parent=1 // pred_check
      _
    $region19: #{tpu_custom_call.1} parent=1 // pred_check_branch
      %41 = sbr.rel (0) target = $region21
    $region20: #{tpu_custom_call.1} parent=1 // pred_region
      %42 = dma.done [#allocation6], 256
    $region21: #{tpu_custom_call.1} parent=1 // pred_fallthru
      _
    %v44 = vld [vmem:[#allocation2] sm:$0xff]
    %v45 = vld [vmem:[#allocation2 + $0x8] sm:$0xff]
    %v46 = vpack.c.bf16 %v45, %v44
    %v47 = vld [vmem:[#allocation5] sm:$0xf]
    %v48 = vld [vmem:[#allocation5 + $0x4] sm:$0xf]
    %v49 = vld [vmem:[#allocation5 + $0x8] sm:$0xf]
    %v50 = vld [vmem:[#allocation5 + $0xc] sm:$0xf]
    %v51 = vld [vmem:[%s2] sm:$0x1]
    %v53 = vlaneseq
    %v54 = vshrl.u32 %v53, 7
    %v55 = vsub.s32 0, %v54
    %v56 = vrot.slane %v51, %v55
    %v62 = vunpack.c.l.b16 %v47
    %v63 = vunpack.c.l.b16 %v48
    %v64 = vunpack.c.l.b16 %v49
    %v65 = vunpack.c.l.b16 %v50
    %v66 = vpack.c.b16 %v63, %v62
    %v67 = vpack.c.b16 %v65, %v64
    %vm70 = vcmask 261120
    %v72 = vsel %vm70, %v46, 0
    %74 = vmatprep.subr.bf16.mxu0 0
    %75 = vmatpush1.bf16.msra.mxu0 %v66
    %76 = vmatprep.subr.bf16.mxu0 0
    %77 = vmatpush1.bf16.msra.mxu0 %v67
    %78 = vmatprep.subr.bf16.mxu0 0
    %79 = vmatpush1.bf16.msra.mxu0 0
    %80 = vmatprep.subr.bf16.mxu0 0
    %81 = vmatpush1.bf16.msra.mxu0 0
    %82 = vmatprep.subr.bf16.mxu0 0
    %83 = vmatpush1.bf16.msra.mxu0 0
    %84 = vmatprep.subr.bf16.mxu0 0
    %85 = vmatpush1.bf16.msra.mxu0 0
    %86 = vmatprep.subr.bf16.mxu0 0
    %87 = vmatpush1.bf16.msra.mxu0 0
    %88 = vmatprep.subr.bf16.mxu0 0
    %89 = vmatpush1.bf16.msra.mxu0 0
    %90 = vmatprep.subr.bf16.mxu0 0
    %91 = vmatpush1.bf16.msra.mxu0 0
    %92 = vmatprep.subr.bf16.mxu0 0
    %93 = vmatpush1.bf16.msra.mxu0 0
    %94 = vmatprep.subr.bf16.mxu0 0
    %95 = vmatpush1.bf16.msra.mxu0 0
    %96 = vmatprep.subr.bf16.mxu0 0
    %97 = vmatpush1.bf16.msra.mxu0 0
    %98 = vmatprep.subr.bf16.mxu0 0
    %99 = vmatpush1.bf16.msra.mxu0 0
    %100 = vmatprep.subr.bf16.mxu0 0
    %101 = vmatpush1.bf16.msra.mxu0 0
    %102 = vmatprep.subr.bf16.mxu0 0
    %103 = vmatpush1.bf16.msra.mxu0 0
    %104 = vmatprep.subr.bf16.mxu0 0
    %105 = vmatpush1.bf16.msra.mxu0 0
    %106 = vmatprep.mubr.bf16.mxu0 0
    %107 = vmatmul.mubr.bf16.gmra.mrb[0].mxu0 %v72
    %v108 = vpop.f32.mrb[0].mxu0
    %v109 = vadd.f32 %v56, %v108
    %v110 = vpop.f32.mrb[0].mxu0
    %v111 = vpop.f32.mrb[0].mxu0
    %v112 = vadd.f32 %v56, %v111
    %v113 = vpop.f32.mrb[0].mxu0
    %114 = vdwg.mxu0
    %115 = vst [vmem:[#allocation7] sm:$0xff] %v109
    %116 = vst [vmem:[#allocation7 + $0x8] sm:$0xff] %v112
    // Predicated region
    $region22: #{tpu_custom_call.1} parent=1 // pred_check
      _
    $region23: #{tpu_custom_call.1} parent=1 // pred_check_branch
      %118 = sbr.rel (0) target = $region25
    $region24: #{tpu_custom_call.1} parent=1 // pred_region
      %s120 = ssub.s32 256, 256
      %121 = vsyncadd [#allocation4], %s120
      %s122 = sshll.u32 [#allocation7], 4
      %s123 = int_to_ptr.vmem [resolvable:$true] %s122
      %128 = dma.vmem_to_hbm [thread:$0]  %s123, 256, %s3, [#allocation4], 128, 128, 8
    $region25: #{tpu_custom_call.1} parent=1 // pred_fallthru
      _
    // Predicated region
    $region26: #{tpu_custom_call.1} parent=1 // pred_check
      _
    $region27: #{tpu_custom_call.1} parent=1 // pred_check_branch
      %130 = sbr.rel (0) target = $region29
    $region28: #{tpu_custom_call.1} parent=1 // pred_region
      %131 = dma.done [#allocation4], 256
    $region29: #{tpu_custom_call.1} parent=1 // pred_fallthru
      _
    %132 = vsyncpa [#allocation3], 1
    %133 = vsyncpa [#allocation6], 1
    %134 = vsyncpa [#allocation4], 1

</llo_original>
